<compile_context>
chip_gen: v7x
topology: tpu7x:2x2x1
jax: 0.10.0
libtpu: 0.0.40
codegen_flags: <defaults>
</compile_context>

<pallas_src>
import functools

import jax
import jax.numpy as jnp
from jax.experimental import pallas as pl
from jax.experimental.pallas import tpu as pltpu

# 5x5 Laplacian (lapl_op) is a 9-tap cross; weights baked in as constants.
_C_OUT = -1.0 / 12.0   # taps at distance 2 from center
_C_MID = 4.0 / 3.0     # taps at distance 1 from center
_C_CTR = -5.0          # center tap


def _fixed_loss_kernel(out_ref, gt_ref, est_ref, gtn_ref, asym_ref, o_ref,
                       acc_ref, *, H, W, C, dt, dx, asym_is_small, n_elem,
                       count_h, count_w):
    c = pl.program_id(0)

    @pl.when(c == 0)
    def _init():
        acc_ref[0] = 0.0

    # per-channel [H, W] tiles (upcast in-kernel; inputs may be bf16)
    out = out_ref[0].astype(jnp.float32)
    gt = gt_ref[0].astype(jnp.float32)
    est = est_ref[0].astype(jnp.float32)
    gtn = gtn_ref[0].astype(jnp.float32)

    # ---------------- fused l2 + asym (single reduce) -------------------------
    d = out - gt
    lt = (gtn < est).astype(jnp.float32)
    nd = est - gtn
    asym_elem = jnp.abs(0.3 - lt) * (nd * nd)
    if asym_is_small:
        aw = asym_ref[0]                                  # (1,1) channel weight
        fused = d * d + (0.5 * aw) * asym_elem
    else:
        fused = d * d + 0.5 * (asym_ref[0].astype(jnp.float32) * asym_elem)
    contrib = jnp.sum(fused) * (1.0 / n_elem)             # l2 + 0.5*asym share

    # ---------------- TV on the [H, W] view (no seam mask needed) -------------
    dh = est[1:, :] - est[:-1, :]                          # sublane slice
    dw = est[:, 1:] - est[:, :-1]                          # lane slice
    contrib = contrib + 0.05 * (jnp.sum(dh * dh) * (1.0 / count_h)
                                + jnp.sum(dw * dw) * (1.0 / count_w))
    acc_ref[0] = acc_ref[0] + contrib

    # ---------------- PDE (physics) term: channels 0..2 only ------------------
    inv_dx2 = 1.0 / (dx * dx)
    H2, W2 = H - 3, W - 3

    def circ_pad(x):                       # [..., H, W] -> [..., H+5, W+5]
        # matches torch.cat circular padding (W first, then H)
        x = jnp.concatenate([x[..., :, -2:], x, x[..., :, :3]], axis=-1)
        x = jnp.concatenate([x[..., -2:, :], x, x[..., :3, :]], axis=-2)
        return x

    def laplace(u, hi, wi):
        """Valid 5x5 cross-correlation with the 9-tap Laplacian cross."""
        ho, wo = hi - 4, wi - 4
        row = u[..., 2:2 + ho, :]          # i == 2 taps (one sublane slice)
        colv = u[..., :, 2:2 + wo]         # j == 2 taps (one lane slice)
        acc = _C_CTR * row[..., 2:2 + wo]
        acc = acc + _C_OUT * (row[..., 0:wo] + row[..., 4:4 + wo])
        acc = acc + _C_MID * (row[..., 1:1 + wo] + row[..., 3:3 + wo])
        acc = acc + _C_OUT * (colv[..., 0:ho, :] + colv[..., 4:4 + ho, :])
        acc = acc + _C_MID * (colv[..., 1:1 + ho, :] + colv[..., 3:3 + ho, :])
        return acc * inv_dx2

    def add_pde():
        noisy = gt + gtn
        # only the 2 unique frames of the 4-frame torch stack are needed
        xp = circ_pad(jnp.stack([noisy, out], axis=0))     # [2, H+5, W+5]
        lap = laplace(xp, H + 5, W + 5)                    # [2, H+1, W+1]
        # exp(-(|lap|/5)^2) * lap ; |lap|^2 == lap^2, 1/5 folded into a multiply
        fxy = jnp.exp(-jnp.square(lap * 0.2)) * lap
        fxy2 = laplace(fxy, H + 1, W + 1)                  # [2, H-3, W-3]
        # u_t = (out - noisy)/(2*dt); both central-diff time slices are equal
        ut = (out[2:2 + H2, 2:2 + W2] - noisy[2:2 + H2, 2:2 + W2]) \
            * (1.0 / (2.0 * dt))
        fu0 = ut - fxy2[0]                                 # "noisy" branch
        fu1 = ut - fxy2[1]                                 # "out"   branch
        pde = jnp.sum(fu0 * fu0 + fu1 * fu1) * (1.0 / float(2 * H2 * W2))
        acc_ref[0] = acc_ref[0] + 0.007 * pde

    if C == 3:
        add_pde()
    else:
        pl.when(c < 3)(add_pde)

    # write the running total every step (lane-dense 128-wide row -> unmasked
    # store); the last grid step leaves the final loss in element [0, 0].
    o_ref[...] = jnp.full((1, 128), acc_ref[0], jnp.float32)


def fixed_loss_forward(out_image, gt_image, est_noise, gt_noise, if_asym,
                       dt=0.5, dx=1.0):
    def prep(x):
        x = jnp.asarray(x)
        if not jnp.issubdtype(x.dtype, jnp.floating):
            x = x.astype(jnp.float32)
        return x

    out_image, gt_image = prep(out_image), prep(gt_image)
    est_noise, gt_noise = prep(est_noise), prep(gt_noise)
    if_asym = prep(if_asym)

    N, C, H, W = out_image.shape
    # PyTorch module squeezes batch dim (needs N==1) and hardcodes channels 0..2
    assert N == 1 and C >= 3, "fixed_loss expects batch=1 and >=3 channels"
    assert H >= 4 and W >= 4

    # free, contiguous per-channel views (sublane=H, lane=W dense)
    out3 = out_image.reshape(C, H, W)
    gt3 = gt_image.reshape(C, H, W)
    est3 = est_noise.reshape(C, H, W)
    gtn3 = gt_noise.reshape(C, H, W)

    asym_is_small = int(if_asym.size) in (1, C)
    if asym_is_small:
        # scalar / per-channel flag -> tiny (C,1,1) weight, no full-slab DMA
        asym_arg = jnp.broadcast_to(
            if_asym.astype(jnp.float32).reshape(-1, 1, 1), (C, 1, 1))
        asym_spec = pl.BlockSpec((1, 1, 1), lambda c: (c, 0, 0))
    else:
        # genuine per-pixel mask -> tiled like the image tensors
        asym_arg = jnp.broadcast_to(if_asym, (N, C, H, W)).reshape(C, H, W)
        asym_spec = pl.BlockSpec((1, H, W), lambda c: (c, 0, 0))

    img_spec = pl.BlockSpec((1, H, W), lambda c: (c, 0, 0))

    kernel = functools.partial(
        _fixed_loss_kernel, H=H, W=W, C=C, dt=float(dt), dx=float(dx),
        asym_is_small=asym_is_small,
        n_elem=float(N * C * H * W),
        count_h=float(C * (H - 1) * W),
        count_w=float(C * H * (W - 1)))

    grid_spec = pltpu.PrefetchScalarGridSpec(
        num_scalar_prefetch=0,
        grid=(C,),
        in_specs=[img_spec, img_spec, img_spec, img_spec, asym_spec],
        out_specs=pl.BlockSpec((1, 128), lambda c: (0, 0)),
        scratch_shapes=[pltpu.SMEM((1,), jnp.float32)])   # running scalar sum

    loss = pl.pallas_call(
        kernel,
        out_shape=jax.ShapeDtypeStruct((1, 128), jnp.float32),
        grid_spec=grid_spec,
        compiler_params=pltpu.CompilerParams(
            # channel axis carries the scalar accumulator -> sequential
            dimension_semantics=("arbitrary",),
            # 48 MiB: within v7x's 64 MiB physical VMEM, plenty on v5e/v6e
            vmem_limit_bytes=48 * 1024 * 1024),
    )(out3, gt3, est3, gtn3, asym_arg)
    return loss[0, 0]


if __name__ == "__main__":
    key = jax.random.PRNGKey(0)
    k1, k2, k3, k4, k5 = jax.random.split(key, 5)
    # batch must be 1 (module squeezes dim 0); PDE term uses channels 0..2
    N, C, H, W = 1, 3, 16, 16

    out_image = jax.random.normal(k1, (N, C, H, W), jnp.float32)
    gt_image = jax.random.normal(k2, (N, C, H, W), jnp.float32)
    est_noise = 0.1 * jax.random.normal(k3, (N, C, H, W), jnp.float32)
    gt_noise = 0.1 * jax.random.normal(k4, (N, C, H, W), jnp.float32)

    # typical usage: per-image scalar flag -> tiny (C,1,1) weight path
    if_asym_scalar = jnp.ones((N, 1, 1, 1), jnp.float32)
    loss_a = fixed_loss_forward(out_image, gt_image, est_noise, gt_noise,
                                if_asym_scalar)

    # per-pixel mask -> full tiled path
    if_asym_mask = (jax.random.uniform(k5, (N, C, H, W)) < 0.5).astype(jnp.float32)
    loss_b = fixed_loss_forward(out_image, gt_image, est_noise, gt_noise,
                                if_asym_mask)

    # bf16 inputs stay bf16 on the wire; upcast happens inside the kernel
    loss_c = fixed_loss_forward(out_image.astype(jnp.bfloat16),
                                gt_image.astype(jnp.bfloat16),
                                est_noise.astype(jnp.bfloat16),
                                gt_noise.astype(jnp.bfloat16),
                                if_asym_scalar)

    jax.block_until_ready((loss_a, loss_b, loss_c))
    assert jnp.isfinite(loss_a) and jnp.isfinite(loss_b) and jnp.isfinite(loss_c)
    print("KERNEL_OK")
</pallas_src>

<mosaic_0001>
module attributes {stable_mosaic.version = 11 : i64} {
  func.func @_fixed_loss_kernel(%arg0: i32, %arg1: memref<1x16x16xf32, #tpu.memory_space<vmem>>, %arg2: memref<1x16x16xf32, #tpu.memory_space<vmem>>, %arg3: memref<1x16x16xf32, #tpu.memory_space<vmem>>, %arg4: memref<1x16x16xf32, #tpu.memory_space<vmem>>, %arg5: memref<1x1x1xf32, #tpu.memory_space<vmem>>, %arg6: memref<1x128xf32, #tpu.memory_space<vmem>>, %arg7: memref<1xf32, #tpu.memory_space<smem>>) attributes {dimension_semantics = [#tpu.dimension_semantics<arbitrary>], iteration_bounds = array<i64: 3>, scalar_prefetch = 0 : i64, scratch_operands = 1 : i64, tpu.core_type = #tpu.core_type<tc>, window_params = [{transform_indices = @transform_0, window_bounds = array<i64: 1, 16, 16>}, {transform_indices = @transform_1, window_bounds = array<i64: 1, 16, 16>}, {transform_indices = @transform_2, window_bounds = array<i64: 1, 16, 16>}, {transform_indices = @transform_3, window_bounds = array<i64: 1, 16, 16>}, {transform_indices = @transform_4, window_bounds = array<i64: 1, 1, 1>}, {pipeline_mode = #tpu.pipeline_mode<synchronous>, transform_indices = @transform_5, window_bounds = array<i64: 1, 128>}]} {
    %c0_i32 = arith.constant 0 : i32
    %0 = arith.cmpi eq, %arg0, %c0_i32 : i32
    %1 = arith.extui %0 : i1 to i32
    %c0_i32_0 = arith.constant 0 : i32
    %2 = arith.cmpi ne, %1, %c0_i32_0 : i32
    scf.if %2 {
      %cst_48 = arith.constant 0.000000e+00 : f32
      %c0_49 = arith.constant 0 : index
      %163 = memref.load %arg7[%c0_49] : memref<1xf32, #tpu.memory_space<smem>>
      memref.store %cst_48, %arg7[%c0_49] : memref<1xf32, #tpu.memory_space<smem>>
    } else {
    }
    %c0 = arith.constant 0 : index
    %c0_1 = arith.constant 0 : index
    %c0_2 = arith.constant 0 : index
    %3 = vector.load %arg1[%c0, %c0_1, %c0_2] : memref<1x16x16xf32, #tpu.memory_space<vmem>>, vector<1x16x16xf32>
    %4 = vector.shape_cast %3 : vector<1x16x16xf32> to vector<16x16xf32>
    %c0_3 = arith.constant 0 : index
    %c0_4 = arith.constant 0 : index
    %c0_5 = arith.constant 0 : index
    %5 = vector.load %arg2[%c0_3, %c0_4, %c0_5] : memref<1x16x16xf32, #tpu.memory_space<vmem>>, vector<1x16x16xf32>
    %6 = vector.shape_cast %5 : vector<1x16x16xf32> to vector<16x16xf32>
    %c0_6 = arith.constant 0 : index
    %c0_7 = arith.constant 0 : index
    %c0_8 = arith.constant 0 : index
    %7 = vector.load %arg3[%c0_6, %c0_7, %c0_8] : memref<1x16x16xf32, #tpu.memory_space<vmem>>, vector<1x16x16xf32>
    %8 = vector.shape_cast %7 : vector<1x16x16xf32> to vector<16x16xf32>
    %c0_9 = arith.constant 0 : index
    %c0_10 = arith.constant 0 : index
    %c0_11 = arith.constant 0 : index
    %9 = vector.load %arg4[%c0_9, %c0_10, %c0_11] : memref<1x16x16xf32, #tpu.memory_space<vmem>>, vector<1x16x16xf32>
    %10 = vector.shape_cast %9 : vector<1x16x16xf32> to vector<16x16xf32>
    %11 = arith.subf %4, %6 : vector<16x16xf32>
    %12 = arith.cmpf olt, %10, %8 : vector<16x16xf32>
    %13 = arith.extui %12 : vector<16x16xi1> to vector<16x16xi32>
    %14 = arith.sitofp %13 : vector<16x16xi32> to vector<16x16xf32>
    %15 = arith.subf %8, %10 : vector<16x16xf32>
    %cst = arith.constant 3.000000e-01 : f32
    %16 = vector.broadcast %cst : f32 to vector<16x16xf32>
    %17 = arith.subf %16, %14 : vector<16x16xf32>
    %18 = math.absf %17 : vector<16x16xf32>
    %19 = arith.mulf %15, %15 : vector<16x16xf32>
    %20 = arith.mulf %18, %19 : vector<16x16xf32>
    %c0_12 = arith.constant 0 : index
    %c0_13 = arith.constant 0 : index
    %c0_14 = arith.constant 0 : index
    %21 = vector.load %arg5[%c0_12, %c0_13, %c0_14] : memref<1x1x1xf32, #tpu.memory_space<vmem>>, vector<1x1x1xf32>
    %22 = vector.shape_cast %21 : vector<1x1x1xf32> to vector<1x1xf32>
    %23 = arith.mulf %11, %11 : vector<16x16xf32>
    %cst_15 = arith.constant 5.000000e-01 : f32
    %24 = vector.broadcast %cst_15 : f32 to vector<1x1xf32>
    %25 = arith.mulf %24, %22 : vector<1x1xf32>
    %26 = vector.broadcast %25 : vector<1x1xf32> to vector<16x16xf32>
    %27 = arith.mulf %26, %20 : vector<16x16xf32>
    %28 = arith.addf %23, %27 : vector<16x16xf32>
    %29 = vector.shape_cast %28 : vector<16x16xf32> to vector<1x16x16xf32>
    %cst_16 = arith.constant dense<0.000000e+00> : vector<1xf32>
    %30 = vector.multi_reduction <add>, %29, %cst_16 [1, 2] : vector<1x16x16xf32> to vector<1xf32>
    %31 = vector.shape_cast %30 : vector<1xf32> to vector<1x1x1xf32>
    %32 = vector.extract %31[0, 0, 0] : f32 from vector<1x1x1xf32>
    %cst_17 = arith.constant 0.00130208337 : f32
    %33 = arith.mulf %32, %cst_17 : f32
    %34 = vector.extract_strided_slice %8 {offsets = [1, 0], sizes = [15, 16], strides = [1, 1]} : vector<16x16xf32> to vector<15x16xf32>
    %35 = vector.extract_strided_slice %8 {offsets = [0, 0], sizes = [15, 16], strides = [1, 1]} : vector<16x16xf32> to vector<15x16xf32>
    %36 = arith.subf %34, %35 : vector<15x16xf32>
    %37 = vector.extract_strided_slice %8 {offsets = [0, 1], sizes = [16, 15], strides = [1, 1]} : vector<16x16xf32> to vector<16x15xf32>
    %38 = vector.extract_strided_slice %8 {offsets = [0, 0], sizes = [16, 15], strides = [1, 1]} : vector<16x16xf32> to vector<16x15xf32>
    %39 = arith.subf %37, %38 : vector<16x15xf32>
    %40 = arith.mulf %36, %36 : vector<15x16xf32>
    %41 = vector.shape_cast %40 : vector<15x16xf32> to vector<1x15x16xf32>
    %cst_18 = arith.constant dense<0.000000e+00> : vector<1xf32>
    %42 = vector.multi_reduction <add>, %41, %cst_18 [1, 2] : vector<1x15x16xf32> to vector<1xf32>
    %43 = vector.shape_cast %42 : vector<1xf32> to vector<1x1x1xf32>
    %44 = vector.extract %43[0, 0, 0] : f32 from vector<1x1x1xf32>
    %cst_19 = arith.constant 0.00138888892 : f32
    %45 = arith.mulf %44, %cst_19 : f32
    %46 = arith.mulf %39, %39 : vector<16x15xf32>
    %47 = vector.shape_cast %46 : vector<16x15xf32> to vector<1x16x15xf32>
    %cst_20 = arith.constant dense<0.000000e+00> : vector<1xf32>
    %48 = vector.multi_reduction <add>, %47, %cst_20 [1, 2] : vector<1x16x15xf32> to vector<1xf32>
    %49 = vector.shape_cast %48 : vector<1xf32> to vector<1x1x1xf32>
    %50 = vector.extract %49[0, 0, 0] : f32 from vector<1x1x1xf32>
    %cst_21 = arith.constant 0.00138888892 : f32
    %51 = arith.mulf %50, %cst_21 : f32
    %52 = arith.addf %45, %51 : f32
    %cst_22 = arith.constant 5.000000e-02 : f32
    %53 = arith.mulf %cst_22, %52 : f32
    %54 = arith.addf %33, %53 : f32
    %c0_23 = arith.constant 0 : index
    %55 = memref.load %arg7[%c0_23] : memref<1xf32, #tpu.memory_space<smem>>
    %56 = arith.addf %55, %54 : f32
    %c0_24 = arith.constant 0 : index
    %57 = memref.load %arg7[%c0_24] : memref<1xf32, #tpu.memory_space<smem>>
    memref.store %56, %arg7[%c0_24] : memref<1xf32, #tpu.memory_space<smem>>
    %58 = arith.addf %6, %10 : vector<16x16xf32>
    %59 = vector.shape_cast %58 : vector<16x16xf32> to vector<1x16x16xf32>
    %60 = vector.shape_cast %4 : vector<16x16xf32> to vector<1x16x16xf32>
    %61 = tpu.concatenate %59, %60 in 0 : vector<1x16x16xf32>, vector<1x16x16xf32> -> vector<2x16x16xf32>
    %62 = vector.extract_strided_slice %61 {offsets = [0, 0, 14], sizes = [2, 16, 2], strides = [1, 1, 1]} : vector<2x16x16xf32> to vector<2x16x2xf32>
    %63 = vector.extract_strided_slice %61 {offsets = [0, 0, 0], sizes = [2, 16, 3], strides = [1, 1, 1]} : vector<2x16x16xf32> to vector<2x16x3xf32>
    %64 = tpu.concatenate %62, %61, %63 in 2 : vector<2x16x2xf32>, vector<2x16x16xf32>, vector<2x16x3xf32> -> vector<2x16x21xf32>
    %65 = vector.extract_strided_slice %64 {offsets = [0, 14, 0], sizes = [2, 2, 21], strides = [1, 1, 1]} : vector<2x16x21xf32> to vector<2x2x21xf32>
    %66 = vector.extract_strided_slice %64 {offsets = [0, 0, 0], sizes = [2, 3, 21], strides = [1, 1, 1]} : vector<2x16x21xf32> to vector<2x3x21xf32>
    %67 = tpu.concatenate %65, %64, %66 in 1 : vector<2x2x21xf32>, vector<2x16x21xf32>, vector<2x3x21xf32> -> vector<2x21x21xf32>
    %68 = vector.extract_strided_slice %67 {offsets = [0, 2, 0], sizes = [2, 17, 21], strides = [1, 1, 1]} : vector<2x21x21xf32> to vector<2x17x21xf32>
    %69 = vector.extract_strided_slice %67 {offsets = [0, 0, 2], sizes = [2, 21, 17], strides = [1, 1, 1]} : vector<2x21x21xf32> to vector<2x21x17xf32>
    %70 = vector.extract_strided_slice %68 {offsets = [0, 0, 2], sizes = [2, 17, 17], strides = [1, 1, 1]} : vector<2x17x21xf32> to vector<2x17x17xf32>
    %cst_25 = arith.constant -5.000000e+00 : f32
    %71 = vector.broadcast %cst_25 : f32 to vector<2x17x17xf32>
    %72 = arith.mulf %71, %70 : vector<2x17x17xf32>
    %73 = vector.extract_strided_slice %68 {offsets = [0, 0, 0], sizes = [2, 17, 17], strides = [1, 1, 1]} : vector<2x17x21xf32> to vector<2x17x17xf32>
    %74 = vector.extract_strided_slice %68 {offsets = [0, 0, 4], sizes = [2, 17, 17], strides = [1, 1, 1]} : vector<2x17x21xf32> to vector<2x17x17xf32>
    %75 = arith.addf %73, %74 : vector<2x17x17xf32>
    %cst_26 = arith.constant -0.0833333358 : f32
    %76 = vector.broadcast %cst_26 : f32 to vector<2x17x17xf32>
    %77 = arith.mulf %76, %75 : vector<2x17x17xf32>
    %78 = arith.addf %72, %77 : vector<2x17x17xf32>
    %79 = vector.extract_strided_slice %68 {offsets = [0, 0, 1], sizes = [2, 17, 17], strides = [1, 1, 1]} : vector<2x17x21xf32> to vector<2x17x17xf32>
    %80 = vector.extract_strided_slice %68 {offsets = [0, 0, 3], sizes = [2, 17, 17], strides = [1, 1, 1]} : vector<2x17x21xf32> to vector<2x17x17xf32>
    %81 = arith.addf %79, %80 : vector<2x17x17xf32>
    %cst_27 = arith.constant 1.33333337 : f32
    %82 = vector.broadcast %cst_27 : f32 to vector<2x17x17xf32>
    %83 = arith.mulf %82, %81 : vector<2x17x17xf32>
    %84 = arith.addf %78, %83 : vector<2x17x17xf32>
    %85 = vector.extract_strided_slice %69 {offsets = [0, 0, 0], sizes = [2, 17, 17], strides = [1, 1, 1]} : vector<2x21x17xf32> to vector<2x17x17xf32>
    %86 = vector.extract_strided_slice %69 {offsets = [0, 4, 0], sizes = [2, 17, 17], strides = [1, 1, 1]} : vector<2x21x17xf32> to vector<2x17x17xf32>
    %87 = arith.addf %85, %86 : vector<2x17x17xf32>
    %cst_28 = arith.constant -0.0833333358 : f32
    %88 = vector.broadcast %cst_28 : f32 to vector<2x17x17xf32>
    %89 = arith.mulf %88, %87 : vector<2x17x17xf32>
    %90 = arith.addf %84, %89 : vector<2x17x17xf32>
    %91 = vector.extract_strided_slice %69 {offsets = [0, 1, 0], sizes = [2, 17, 17], strides = [1, 1, 1]} : vector<2x21x17xf32> to vector<2x17x17xf32>
    %92 = vector.extract_strided_slice %69 {offsets = [0, 3, 0], sizes = [2, 17, 17], strides = [1, 1, 1]} : vector<2x21x17xf32> to vector<2x17x17xf32>
    %93 = arith.addf %91, %92 : vector<2x17x17xf32>
    %cst_29 = arith.constant 1.33333337 : f32
    %94 = vector.broadcast %cst_29 : f32 to vector<2x17x17xf32>
    %95 = arith.mulf %94, %93 : vector<2x17x17xf32>
    %96 = arith.addf %90, %95 : vector<2x17x17xf32>
    %cst_30 = arith.constant 1.000000e+00 : f32
    %97 = vector.broadcast %cst_30 : f32 to vector<2x17x17xf32>
    %98 = arith.mulf %96, %97 : vector<2x17x17xf32>
    %cst_31 = arith.constant 2.000000e-01 : f32
    %99 = vector.broadcast %cst_31 : f32 to vector<2x17x17xf32>
    %100 = arith.mulf %98, %99 : vector<2x17x17xf32>
    %101 = arith.mulf %100, %100 : vector<2x17x17xf32>
    %cst_32 = arith.constant 0.000000e+00 : f32
    %102 = vector.broadcast %cst_32 : f32 to vector<2x17x17xf32>
    %103 = arith.subf %102, %101 : vector<2x17x17xf32>
    %104 = math.exp %103 : vector<2x17x17xf32>
    %105 = arith.mulf %104, %98 : vector<2x17x17xf32>
    %106 = vector.extract_strided_slice %105 {offsets = [0, 2, 0], sizes = [2, 13, 17], strides = [1, 1, 1]} : vector<2x17x17xf32> to vector<2x13x17xf32>
    %107 = vector.extract_strided_slice %105 {offsets = [0, 0, 2], sizes = [2, 17, 13], strides = [1, 1, 1]} : vector<2x17x17xf32> to vector<2x17x13xf32>
    %108 = vector.extract_strided_slice %106 {offsets = [0, 0, 2], sizes = [2, 13, 13], strides = [1, 1, 1]} : vector<2x13x17xf32> to vector<2x13x13xf32>
    %cst_33 = arith.constant -5.000000e+00 : f32
    %109 = vector.broadcast %cst_33 : f32 to vector<2x13x13xf32>
    %110 = arith.mulf %109, %108 : vector<2x13x13xf32>
    %111 = vector.extract_strided_slice %106 {offsets = [0, 0, 0], sizes = [2, 13, 13], strides = [1, 1, 1]} : vector<2x13x17xf32> to vector<2x13x13xf32>
    %112 = vector.extract_strided_slice %106 {offsets = [0, 0, 4], sizes = [2, 13, 13], strides = [1, 1, 1]} : vector<2x13x17xf32> to vector<2x13x13xf32>
    %113 = arith.addf %111, %112 : vector<2x13x13xf32>
    %cst_34 = arith.constant -0.0833333358 : f32
    %114 = vector.broadcast %cst_34 : f32 to vector<2x13x13xf32>
    %115 = arith.mulf %114, %113 : vector<2x13x13xf32>
    %116 = arith.addf %110, %115 : vector<2x13x13xf32>
    %117 = vector.extract_strided_slice %106 {offsets = [0, 0, 1], sizes = [2, 13, 13], strides = [1, 1, 1]} : vector<2x13x17xf32> to vector<2x13x13xf32>
    %118 = vector.extract_strided_slice %106 {offsets = [0, 0, 3], sizes = [2, 13, 13], strides = [1, 1, 1]} : vector<2x13x17xf32> to vector<2x13x13xf32>
    %119 = arith.addf %117, %118 : vector<2x13x13xf32>
    %cst_35 = arith.constant 1.33333337 : f32
    %120 = vector.broadcast %cst_35 : f32 to vector<2x13x13xf32>
    %121 = arith.mulf %120, %119 : vector<2x13x13xf32>
    %122 = arith.addf %116, %121 : vector<2x13x13xf32>
    %123 = vector.extract_strided_slice %107 {offsets = [0, 0, 0], sizes = [2, 13, 13], strides = [1, 1, 1]} : vector<2x17x13xf32> to vector<2x13x13xf32>
    %124 = vector.extract_strided_slice %107 {offsets = [0, 4, 0], sizes = [2, 13, 13], strides = [1, 1, 1]} : vector<2x17x13xf32> to vector<2x13x13xf32>
    %125 = arith.addf %123, %124 : vector<2x13x13xf32>
    %cst_36 = arith.constant -0.0833333358 : f32
    %126 = vector.broadcast %cst_36 : f32 to vector<2x13x13xf32>
    %127 = arith.mulf %126, %125 : vector<2x13x13xf32>
    %128 = arith.addf %122, %127 : vector<2x13x13xf32>
    %129 = vector.extract_strided_slice %107 {offsets = [0, 1, 0], sizes = [2, 13, 13], strides = [1, 1, 1]} : vector<2x17x13xf32> to vector<2x13x13xf32>
    %130 = vector.extract_strided_slice %107 {offsets = [0, 3, 0], sizes = [2, 13, 13], strides = [1, 1, 1]} : vector<2x17x13xf32> to vector<2x13x13xf32>
    %131 = arith.addf %129, %130 : vector<2x13x13xf32>
    %cst_37 = arith.constant 1.33333337 : f32
    %132 = vector.broadcast %cst_37 : f32 to vector<2x13x13xf32>
    %133 = arith.mulf %132, %131 : vector<2x13x13xf32>
    %134 = arith.addf %128, %133 : vector<2x13x13xf32>
    %cst_38 = arith.constant 1.000000e+00 : f32
    %135 = vector.broadcast %cst_38 : f32 to vector<2x13x13xf32>
    %136 = arith.mulf %134, %135 : vector<2x13x13xf32>
    %137 = vector.extract_strided_slice %4 {offsets = [2, 2], sizes = [13, 13], strides = [1, 1]} : vector<16x16xf32> to vector<13x13xf32>
    %138 = vector.extract_strided_slice %58 {offsets = [2, 2], sizes = [13, 13], strides = [1, 1]} : vector<16x16xf32> to vector<13x13xf32>
    %139 = arith.subf %137, %138 : vector<13x13xf32>
    %cst_39 = arith.constant 1.000000e+00 : f32
    %140 = vector.broadcast %cst_39 : f32 to vector<13x13xf32>
    %141 = arith.mulf %139, %140 : vector<13x13xf32>
    %142 = vector.extract_strided_slice %136 {offsets = [0, 0, 0], sizes = [1, 13, 13], strides = [1, 1, 1]} : vector<2x13x13xf32> to vector<1x13x13xf32>
    %143 = vector.shape_cast %142 : vector<1x13x13xf32> to vector<13x13xf32>
    %144 = arith.subf %141, %143 : vector<13x13xf32>
    %145 = vector.extract_strided_slice %136 {offsets = [1, 0, 0], sizes = [1, 13, 13], strides = [1, 1, 1]} : vector<2x13x13xf32> to vector<1x13x13xf32>
    %146 = vector.shape_cast %145 : vector<1x13x13xf32> to vector<13x13xf32>
    %147 = arith.subf %141, %146 : vector<13x13xf32>
    %148 = arith.mulf %144, %144 : vector<13x13xf32>
    %149 = arith.mulf %147, %147 : vector<13x13xf32>
    %150 = arith.addf %148, %149 : vector<13x13xf32>
    %151 = vector.shape_cast %150 : vector<13x13xf32> to vector<1x13x13xf32>
    %cst_40 = arith.constant dense<0.000000e+00> : vector<1xf32>
    %152 = vector.multi_reduction <add>, %151, %cst_40 [1, 2] : vector<1x13x13xf32> to vector<1xf32>
    %153 = vector.shape_cast %152 : vector<1xf32> to vector<1x1x1xf32>
    %154 = vector.extract %153[0, 0, 0] : f32 from vector<1x1x1xf32>
    %cst_41 = arith.constant 2.958580e-03 : f32
    %155 = arith.mulf %154, %cst_41 : f32
    %c0_42 = arith.constant 0 : index
    %156 = memref.load %arg7[%c0_42] : memref<1xf32, #tpu.memory_space<smem>>
    %cst_43 = arith.constant 7.000000e-03 : f32
    %157 = arith.mulf %cst_43, %155 : f32
    %158 = arith.addf %156, %157 : f32
    %c0_44 = arith.constant 0 : index
    %159 = memref.load %arg7[%c0_44] : memref<1xf32, #tpu.memory_space<smem>>
    memref.store %158, %arg7[%c0_44] : memref<1xf32, #tpu.memory_space<smem>>
    %c0_45 = arith.constant 0 : index
    %160 = memref.load %arg7[%c0_45] : memref<1xf32, #tpu.memory_space<smem>>
    %161 = vector.broadcast %160 : f32 to vector<1x128xf32>
    %c0_46 = arith.constant 0 : index
    %c0_47 = arith.constant 0 : index
    %162 = vector.load %arg6[%c0_46, %c0_47] : memref<1x128xf32, #tpu.memory_space<vmem>>, vector<1x128xf32>
    tpu.vector_store %arg6[%c0_46, %c0_47], %161 {strides = array<i32>} : memref<1x128xf32, #tpu.memory_space<vmem>>, vector<1x128xf32>,
    return
  }
  func.func @transform_0(%arg0: i32) -> (i32, i32, i32) {
    %c0_i32 = arith.constant 0 : i32
    %c0_i32_0 = arith.constant 0 : i32
    %c0_i32_1 = arith.constant 0 : i32
    return %arg0, %c0_i32, %c0_i32_0 : i32, i32, i32
  }
  func.func @transform_1(%arg0: i32) -> (i32, i32, i32) {
    %c0_i32 = arith.constant 0 : i32
    %c0_i32_0 = arith.constant 0 : i32
    %c0_i32_1 = arith.constant 0 : i32
    return %arg0, %c0_i32, %c0_i32_0 : i32, i32, i32
  }
  func.func @transform_2(%arg0: i32) -> (i32, i32, i32) {
    %c0_i32 = arith.constant 0 : i32
    %c0_i32_0 = arith.constant 0 : i32
    %c0_i32_1 = arith.constant 0 : i32
    return %arg0, %c0_i32, %c0_i32_0 : i32, i32, i32
  }
  func.func @transform_3(%arg0: i32) -> (i32, i32, i32) {
    %c0_i32 = arith.constant 0 : i32
    %c0_i32_0 = arith.constant 0 : i32
    %c0_i32_1 = arith.constant 0 : i32
    return %arg0, %c0_i32, %c0_i32_0 : i32, i32, i32
  }
  func.func @transform_4(%arg0: i32) -> (i32, i32, i32) {
    %c0_i32 = arith.constant 0 : i32
    %c0_i32_0 = arith.constant 0 : i32
    %c0_i32_1 = arith.constant 0 : i32
    return %arg0, %c0_i32, %c0_i32_0 : i32, i32, i32
  }
  func.func @transform_5(%arg0: i32) -> (i32, i32) {
    %c0_i32 = arith.constant 0 : i32
    %c0_i32_0 = arith.constant 0 : i32
    %c0_i32_1 = arith.constant 0 : i32
    return %c0_i32, %c0_i32_0 : i32, i32
  }
}

</mosaic_0001>

<llo_original>
// kernel: tpu_custom_call.1
$region0: #{tpu_custom_call.1}
  #allocation0 [shape = 'u32[]', space=smem, size = 0x4, offset = 0x4, fixed_abs, tag = 'smem constant byte address 0x4 - core index']
  #allocation1 [shape = 'u32[144,128]{1,0:T(1,128)}', space=vmem, size = 0x12000, scoped, tag = 'internal scratch']
  #allocation2 [shape = 'f32[1]{0:T(128)}', space=smem, size = 0x200, scoped, tag = 'scratch operand']
  %s0 = inlined_call_operand.hbm [shape: f32[3,16,16], index: 0, kind: input, shape index: {}]
  %s1 = inlined_call_operand.hbm [shape: f32[3,16,16], index: 1, kind: input, shape index: {}]
  %s2 = inlined_call_operand.hbm [shape: f32[3,16,16], index: 2, kind: input, shape index: {}]
  %s3 = inlined_call_operand.hbm [shape: f32[3,16,16], index: 3, kind: input, shape index: {}]
  %s4 = inlined_call_operand.vmem [shape: f32[3,1,1], index: 4, kind: input, shape index: {}]
  %s5 = inlined_call_operand.hbm [shape: f32[1,128], index: 5, kind: output, shape index: {}]
  %s6 = sld [smem:[#allocation0]]
  $region73: #{tpu_custom_call.1} parent=0
    _
  %s8 = ssub.s32 1, %s6
  %s9 = scalar_select 0, %s8, %s6
  $region1: #{tpu_custom_call.1} parent=0
    #allocation3 [shape = 'u8[16384]{0}', space=vmem, size = 0x4000, scoped, tag = 'input window, operand 0']
    #allocation4 [shape = 's32[2]{0}', space=sflag, size = 0x8, scoped, tag = 'scoped memory for tpu_custom_call.1']
    #allocation5 [shape = 's32[2]{0}', space=sflag, size = 0x8, scoped, tag = 'scoped memory for tpu_custom_call.1']
    #allocation6 [shape = 'u8[16384]{0}', space=vmem, size = 0x4000, scoped, tag = 'input window, operand 1']
    #allocation7 [shape = 's32[2]{0}', space=sflag, size = 0x8, scoped, tag = 'scoped memory for tpu_custom_call.1']
    #allocation8 [shape = 'u8[16384]{0}', space=vmem, size = 0x4000, scoped, tag = 'input window, operand 2']
    #allocation9 [shape = 'u8[16384]{0}', space=vmem, size = 0x4000, scoped, tag = 'input window, operand 3']
    #allocation10 [shape = 's32[2]{0}', space=sflag, size = 0x8, scoped, tag = 'scoped memory for tpu_custom_call.1']
    #allocation11 [shape = 'u8[512]{0}', space=vmem, size = 0x400, scoped, tag = 'output window, operand 0, single buffered']
    %10 = vsyncpa [#allocation4], 0
    %s11 = scalar_lea.sflag [#allocation4], 1
    %12 = vsyncpa %s11, 0
    %13 = vsyncpa [#allocation7], 0
    %s14 = scalar_lea.sflag [#allocation7], 1
    %15 = vsyncpa %s14, 0
    %16 = vsyncpa [#allocation10], 0
    %s17 = scalar_lea.sflag [#allocation10], 1
    %18 = vsyncpa %s17, 0
    %19 = vsyncpa [#allocation5], 0
    loop: start=0, step=1, limit=5
    $region2: #{tpu_custom_call.1} parent=1 // loop_pre_header
      _
    $region3: #{tpu_custom_call.1} parent=1 // loop_header
      %s21 = sphi 0, %s25
      %p22 = scmp.ge.s32.totalorder %s21, 5
      %s31 = sphi 0, %s33
      %s34 = sphi 0, %s31
      %s35 = sphi 0, %s34
      %s51 = sphi 0, %s35
      %s57 = sphi 0, %s59
      %s60 = sphi 0, %s57
      %s61 = sphi 0, %s60
      %s77 = sphi 0, %s61
      %s83 = sphi 0, %s85
      %s86 = sphi 0, %s83
      %s87 = sphi 0, %s86
      %s103 = sphi 0, %s87
      %s109 = sphi 0, %s111
      %s112 = sphi 0, %s109
      %s113 = sphi 0, %s112
      %s129 = sphi 0, %s113
      %s135 = sphi 0, %s137
      %s138 = sphi 0, %s135
      %s139 = sphi 0, %s138
      %s155 = sphi 0, %s139
      %s159 = sphi 0, %s159
      %s161 = sphi 0, %s159
      %s162 = sphi 0, %s161
      %s176 = sphi 0, %s162
    $region4: #{tpu_custom_call.1} parent=1 // loop_header_branch
      %24 = sbr.rel (%p22) target = $region8
    $region5: #{tpu_custom_call.1} parent=1 // loop_body
      %s26 = ssub.s32 %s21, 1
      %s27 = ssub.s32 %s21, 2
      %s28 = sadd.s32 %s21, 1
      %s29 = ssub.s32 %s21, %s28
      %p30 = scmp.eq.s32.totalorder %s29, 0
      %s32 = sadd.s32 %s31, 1
      %s33 = scalar_select %p30, %s31, %s32
      %p36 = pneg %p30
      %p37 = scmp.eq.s32.totalorder %s21, 2
      %p38 = por %p36, %p37
      %p39 = scmp.ne.s32.totalorder %s31, %s34
      %p40 = scmp.eq.s32.totalorder %s21, 0
      %p41 = por %p39, %p40
      %p42 = scmp.ne.s32.totalorder %s31, %s34
      %p43 = scmp.eq.s32.totalorder %s26, 2
      %p44 = por %p42, %p43
      %p45 = scmp.ne.s32.totalorder %s34, %s35
      %p46 = scmp.eq.s32.totalorder %s26, 0
      %p47 = por %p45, %p46
      %p48 = scmp.ne.s32.totalorder %s34, %s35
      %p49 = scmp.eq.s32.totalorder %s27, 2
      %p50 = por %p48, %p49
      %p52 = scmp.ne.s32.totalorder %s35, %s51
      %p53 = scmp.eq.s32.totalorder %s27, 0
      %p54 = por %p52, %p53
      %s55 = ssub.s32 %s21, %s28
      %p56 = scmp.eq.s32.totalorder %s55, 0
      %s58 = sadd.s32 %s57, 1
      %s59 = scalar_select %p56, %s57, %s58
      %p62 = pneg %p56
      %p63 = scmp.eq.s32.totalorder %s21, 2
      %p64 = por %p62, %p63
      %p65 = scmp.ne.s32.totalorder %s57, %s60
      %p66 = scmp.eq.s32.totalorder %s21, 0
      %p67 = por %p65, %p66
      %p68 = scmp.ne.s32.totalorder %s57, %s60
      %p69 = scmp.eq.s32.totalorder %s26, 2
      %p70 = por %p68, %p69
      %p71 = scmp.ne.s32.totalorder %s60, %s61
      %p72 = scmp.eq.s32.totalorder %s26, 0
      %p73 = por %p71, %p72
      %p74 = scmp.ne.s32.totalorder %s60, %s61
      %p75 = scmp.eq.s32.totalorder %s27, 2
      %p76 = por %p74, %p75
      %p78 = scmp.ne.s32.totalorder %s61, %s77
      %p79 = scmp.eq.s32.totalorder %s27, 0
      %p80 = por %p78, %p79
      %s81 = ssub.s32 %s21, %s28
      %p82 = scmp.eq.s32.totalorder %s81, 0
      %s84 = sadd.s32 %s83, 1
      %s85 = scalar_select %p82, %s83, %s84
      %p88 = pneg %p82
      %p89 = scmp.eq.s32.totalorder %s21, 2
      %p90 = por %p88, %p89
      %p91 = scmp.ne.s32.totalorder %s83, %s86
      %p92 = scmp.eq.s32.totalorder %s21, 0
      %p93 = por %p91, %p92
      %p94 = scmp.ne.s32.totalorder %s83, %s86
      %p95 = scmp.eq.s32.totalorder %s26, 2
      %p96 = por %p94, %p95
      %p97 = scmp.ne.s32.totalorder %s86, %s87
      %p98 = scmp.eq.s32.totalorder %s26, 0
      %p99 = por %p97, %p98
      %p100 = scmp.ne.s32.totalorder %s86, %s87
      %p101 = scmp.eq.s32.totalorder %s27, 2
      %p102 = por %p100, %p101
      %p104 = scmp.ne.s32.totalorder %s87, %s103
      %p105 = scmp.eq.s32.totalorder %s27, 0
      %p106 = por %p104, %p105
      %s107 = ssub.s32 %s21, %s28
      %p108 = scmp.eq.s32.totalorder %s107, 0
      %s110 = sadd.s32 %s109, 1
      %s111 = scalar_select %p108, %s109, %s110
      %p114 = pneg %p108
      %p115 = scmp.eq.s32.totalorder %s21, 2
      %p116 = por %p114, %p115
      %p117 = scmp.ne.s32.totalorder %s109, %s112
      %p118 = scmp.eq.s32.totalorder %s21, 0
      %p119 = por %p117, %p118
      %p120 = scmp.ne.s32.totalorder %s109, %s112
      %p121 = scmp.eq.s32.totalorder %s26, 2
      %p122 = por %p120, %p121
      %p123 = scmp.ne.s32.totalorder %s112, %s113
      %p124 = scmp.eq.s32.totalorder %s26, 0
      %p125 = por %p123, %p124
      %p126 = scmp.ne.s32.totalorder %s112, %s113
      %p127 = scmp.eq.s32.totalorder %s27, 2
      %p128 = por %p126, %p127
      %p130 = scmp.ne.s32.totalorder %s113, %s129
      %p131 = scmp.eq.s32.totalorder %s27, 0
      %p132 = por %p130, %p131
      %s133 = ssub.s32 %s21, %s28
      %p134 = scmp.eq.s32.totalorder %s133, 0
      %s136 = sadd.s32 %s135, 1
      %s137 = scalar_select %p134, %s135, %s136
      %p140 = pneg %p134
      %p141 = scmp.eq.s32.totalorder %s21, 2
      %p142 = por %p140, %p141
      %p143 = scmp.ne.s32.totalorder %s135, %s138
      %p144 = scmp.eq.s32.totalorder %s21, 0
      %p145 = por %p143, %p144
      %p146 = scmp.ne.s32.totalorder %s135, %s138
      %p147 = scmp.eq.s32.totalorder %s26, 2
      %p148 = por %p146, %p147
      %p149 = scmp.ne.s32.totalorder %s138, %s139
      %p150 = scmp.eq.s32.totalorder %s26, 0
      %p151 = por %p149, %p150
      %p152 = scmp.ne.s32.totalorder %s138, %s139
      %p153 = scmp.eq.s32.totalorder %s27, 2
      %p154 = por %p152, %p153
      %p156 = scmp.ne.s32.totalorder %s139, %s155
      %p157 = scmp.eq.s32.totalorder %s27, 0
      %p158 = por %p156, %p157
      %s160 = sadd.s32 %s159, 1
      %p163 = scmp.eq.s32.totalorder %s21, 2
      %p164 = scmp.ne.s32.totalorder %s159, %s161
      %p165 = scmp.eq.s32.totalorder %s21, 0
      %p166 = por %p164, %p165
      %p167 = scmp.ne.s32.totalorder %s159, %s161
      %p168 = scmp.eq.s32.totalorder %s26, 2
      %p169 = por %p167, %p168
      %p170 = scmp.ne.s32.totalorder %s161, %s162
      %p171 = scmp.eq.s32.totalorder %s26, 0
      %p172 = por %p170, %p171
      %p173 = scmp.ne.s32.totalorder %s161, %s162
      %p174 = scmp.eq.s32.totalorder %s27, 2
      %p175 = por %p173, %p174
      %p177 = scmp.ne.s32.totalorder %s162, %s176
      %p178 = scmp.eq.s32.totalorder %s27, 0
      %p179 = por %p177, %p178
      %p180 = scmp.le.s32.totalorder 1, %s21
      %p181 = scmp.lt.s32.totalorder %s21, 4
      %p182 = pnand %p180, %p181
      %p183 = pneg %p182
      // Predicated region
      $region9: #{tpu_custom_call.1} parent=5 // pred_check
        _
      $region10: #{tpu_custom_call.1} parent=5 // pred_check_branch
        %185 = sbr.rel (%p182) target = $region12
      $region11: #{tpu_custom_call.1} parent=5 // pred_region
        %s186 = ssub.s32 %s21, 1
      $region12: #{tpu_custom_call.1} parent=5 // pred_fallthru
        _
      %p187 = scmp.lt.s32.totalorder %s21, 3
      // Predicated region
      $region13: #{tpu_custom_call.1} parent=5 // pred_check
        %p188 = pneg %p187
      $region14: #{tpu_custom_call.1} parent=5 // pred_check_branch
        %190 = sbr.rel (%p188) target = $region16
      $region15: #{tpu_custom_call.1} parent=5 // pred_region
        // Predicated region
        $region17: #{tpu_custom_call.1} parent=15 // pred_check
          %p191 = pneg %p41
        $region18: #{tpu_custom_call.1} parent=15 // pred_check_branch
          %193 = sbr.rel (%p191) target = $region20
        $region19: #{tpu_custom_call.1} parent=15 // pred_region
          %s194 = sand.u32 %s31, 1
          %s195 = scalar_lea.sflag [#allocation4], %s194
          %s196 = sand.u32 %s31, 1
          %s197 = smul.addr %s196, 16
          %s198 = scalar_lea.vmem [#allocation3], %s197
          %s200 = ssub.s32 256, 256
          %201 = vsyncadd %s195, %s200
          %s202 = smul.addr %s21, 2
          %s203 = smul.addr %s202, 128
          %s204 = scalar_lea.hbm %s0, %s203
          %s205 = sshll.u32 %s198, 4
          %s206 = int_to_ptr.vmem [resolvable:$true] %s205
          %211 = dma.hbm_to_vmem [thread:$0]  %s204, 256, %s206, %s195, 128, 128, 8
        $region20: #{tpu_custom_call.1} parent=15 // pred_fallthru
          _
        // Predicated region
        $region21: #{tpu_custom_call.1} parent=15 // pred_check
          %p212 = pneg %p67
        $region22: #{tpu_custom_call.1} parent=15 // pred_check_branch
          %214 = sbr.rel (%p212) target = $region24
        $region23: #{tpu_custom_call.1} parent=15 // pred_region
          %s215 = sand.u32 %s21, 1
          %s216 = scalar_lea.sflag [#allocation7], %s215
          %s217 = sand.u32 %s57, 1
          %s218 = smul.addr %s217, 16
          %s219 = scalar_lea.vmem [#allocation6], %s218
          %s221 = ssub.s32 256, 256
          %222 = vsyncadd %s216, %s221
          %s223 = smul.addr %s21, 2
          %s224 = smul.addr %s223, 128
          %s225 = scalar_lea.hbm %s1, %s224
          %s226 = sshll.u32 %s219, 4
          %s227 = int_to_ptr.vmem [resolvable:$true] %s226
          %232 = dma.hbm_to_vmem [thread:$0]  %s225, 256, %s227, %s216, 128, 128, 8
        $region24: #{tpu_custom_call.1} parent=15 // pred_fallthru
          _
        // Predicated region
        $region25: #{tpu_custom_call.1} parent=15 // pred_check
          %p233 = pneg %p93
        $region26: #{tpu_custom_call.1} parent=15 // pred_check_branch
          %235 = sbr.rel (%p233) target = $region28
        $region27: #{tpu_custom_call.1} parent=15 // pred_region
          %s236 = sand.u32 %s21, 1
          %s237 = scalar_lea.sflag [#allocation7], %s236
          %s238 = sand.u32 %s83, 1
          %s239 = smul.addr %s238, 16
          %s240 = scalar_lea.vmem [#allocation8], %s239
          %s242 = ssub.s32 256, 256
          %243 = vsyncadd %s237, %s242
          %s244 = smul.addr %s21, 2
          %s245 = smul.addr %s244, 128
          %s246 = scalar_lea.hbm %s2, %s245
          %s247 = sshll.u32 %s240, 4
          %s248 = int_to_ptr.vmem [resolvable:$true] %s247
          %253 = dma.hbm_to_vmem [thread:$0]  %s246, 256, %s248, %s237, 128, 128, 8
        $region28: #{tpu_custom_call.1} parent=15 // pred_fallthru
          _
        // Predicated region
        $region29: #{tpu_custom_call.1} parent=15 // pred_check
          %p254 = pneg %p119
        $region30: #{tpu_custom_call.1} parent=15 // pred_check_branch
          %256 = sbr.rel (%p254) target = $region32
        $region31: #{tpu_custom_call.1} parent=15 // pred_region
          %s257 = sand.u32 %s109, 1
          %s258 = scalar_lea.sflag [#allocation10], %s257
          %s259 = sand.u32 %s109, 1
          %s260 = smul.addr %s259, 16
          %s261 = scalar_lea.vmem [#allocation9], %s260
          %s263 = ssub.s32 256, 256
          %264 = vsyncadd %s258, %s263
          %s265 = smul.addr %s21, 2
          %s266 = smul.addr %s265, 128
          %s267 = scalar_lea.hbm %s3, %s266
          %s268 = sshll.u32 %s261, 4
          %s269 = int_to_ptr.vmem [resolvable:$true] %s268
          %274 = dma.hbm_to_vmem [thread:$0]  %s267, 256, %s269, %s258, 128, 128, 8
        $region32: #{tpu_custom_call.1} parent=15 // pred_fallthru
          _
        // Predicated region
        $region33: #{tpu_custom_call.1} parent=15 // pred_check
          %p275 = pneg %p145
        $region34: #{tpu_custom_call.1} parent=15 // pred_check_branch
          %277 = sbr.rel (%p275) target = $region36
        $region35: #{tpu_custom_call.1} parent=15 // pred_region
          %p278 = scmp.lt.s32.totalorder %s21, 2
          %s279 = scalar_select %p278, %s21, 2
          %s280 = scalar_lea.vmem %s4, %s279
        $region36: #{tpu_custom_call.1} parent=15 // pred_fallthru
          _
      $region16: #{tpu_custom_call.1} parent=5 // pred_fallthru
        _
      %p281 = scmp.le.s32.totalorder 1, %s21
      %p282 = scmp.lt.s32.totalorder %s21, 4
      %p283 = pnand %p281, %p282
      %p284 = pneg %p283
      // Predicated region
      $region37: #{tpu_custom_call.1} parent=5 // pred_check
        _
      $region38: #{tpu_custom_call.1} parent=5 // pred_check_branch
        %286 = sbr.rel (%p283) target = $region40
      $region39: #{tpu_custom_call.1} parent=5 // pred_region
        %s287 = ssub.s32 %s21, 1
        %s288 = sand.u32 %s34, 1
        %s289 = scalar_lea.sflag [#allocation4], %s288
        %s290 = sand.u32 %s34, 1
        %s291 = smul.addr %s290, 16
        %s292 = scalar_lea.vmem [#allocation3], %s291
        // Predicated region
        $region41: #{tpu_custom_call.1} parent=39 // pred_check
          %p293 = pneg %p47
        $region42: #{tpu_custom_call.1} parent=39 // pred_check_branch
          %295 = sbr.rel (%p293) target = $region44
        $region43: #{tpu_custom_call.1} parent=39 // pred_region
          %296 = dma.done %s289, 256
        $region44: #{tpu_custom_call.1} parent=39 // pred_fallthru
          _
        %s297 = sand.u32 %s26, 1
        %s298 = scalar_lea.sflag [#allocation7], %s297
        %s299 = sand.u32 %s60, 1
        %s300 = smul.addr %s299, 16
        %s301 = scalar_lea.vmem [#allocation6], %s300
        // Predicated region
        $region45: #{tpu_custom_call.1} parent=39 // pred_check
          %p302 = pneg %p73
        $region46: #{tpu_custom_call.1} parent=39 // pred_check_branch
          %304 = sbr.rel (%p302) target = $region48
        $region47: #{tpu_custom_call.1} parent=39 // pred_region
          %305 = dma.done %s298, 256
        $region48: #{tpu_custom_call.1} parent=39 // pred_fallthru
          _
        %s306 = sand.u32 %s26, 1
        %s307 = scalar_lea.sflag [#allocation7], %s306
        %s308 = sand.u32 %s86, 1
        %s309 = smul.addr %s308, 16
        %s310 = scalar_lea.vmem [#allocation8], %s309
        // Predicated region
        $region49: #{tpu_custom_call.1} parent=39 // pred_check
          %p311 = pneg %p99
        $region50: #{tpu_custom_call.1} parent=39 // pred_check_branch
          %313 = sbr.rel (%p311) target = $region52
        $region51: #{tpu_custom_call.1} parent=39 // pred_region
          %314 = dma.done %s307, 256
        $region52: #{tpu_custom_call.1} parent=39 // pred_fallthru
          _
        %s315 = sand.u32 %s112, 1
        %s316 = scalar_lea.sflag [#allocation10], %s315
        %s317 = sand.u32 %s112, 1
        %s318 = smul.addr %s317, 16
        %s319 = scalar_lea.vmem [#allocation9], %s318
        // Predicated region
        $region53: #{tpu_custom_call.1} parent=39 // pred_check
          %p320 = pneg %p125
        $region54: #{tpu_custom_call.1} parent=39 // pred_check_branch
          %322 = sbr.rel (%p320) target = $region56
        $region55: #{tpu_custom_call.1} parent=39 // pred_region
          %323 = dma.done %s316, 256
        $region56: #{tpu_custom_call.1} parent=39 // pred_fallthru
          _
        %s324 = sand.u32 %s34, 1
        %s325 = scalar_lea.sflag [#allocation4], %s324
        %s326 = sand.u32 %s34, 1
        %s327 = smul.addr %s326, 16
        %s328 = scalar_lea.vmem [#allocation3], %s327
        %p329 = pneg %p47
        %p330 = pneg %p44
        %s331 = sand.u32 %s26, 1
        %s332 = scalar_lea.sflag [#allocation7], %s331
        %s333 = sand.u32 %s60, 1
        %s334 = smul.addr %s333, 16
        %s335 = scalar_lea.vmem [#allocation6], %s334
        %p336 = pneg %p73
        %p337 = pneg %p70
        %s338 = sand.u32 %s26, 1
        %s339 = scalar_lea.sflag [#allocation7], %s338
        %s340 = sand.u32 %s86, 1
        %s341 = smul.addr %s340, 16
        %s342 = scalar_lea.vmem [#allocation8], %s341
        %p343 = pneg %p99
        %p344 = pneg %p96
        %s345 = sand.u32 %s112, 1
        %s346 = scalar_lea.sflag [#allocation10], %s345
        %s347 = sand.u32 %s112, 1
        %s348 = smul.addr %s347, 16
        %s349 = scalar_lea.vmem [#allocation9], %s348
        %p350 = pneg %p125
        %p351 = pneg %p122
        %p352 = scmp.lt.s32.totalorder %s26, 2
        %s353 = scalar_select %p352, %s26, 2
        %s354 = scalar_lea.vmem %s4, %s353
        %p355 = pneg %p151
        %p356 = pneg %p148
        %p357 = pneg %p172
        %p358 = pneg %p169
        %p359 = scmp.lt.s32.totalorder %s26, 2
        %s360 = scalar_select %p359, %s26, 2
        %s361 = scalar_lea.vmem %s4, %s360
        %p362 = scmp.eq.s32.totalorder %s26, 0
        // Predicated region
        $region57: #{tpu_custom_call.1} parent=39 // pred_check
          %p363 = pneg %p362
        $region58: #{tpu_custom_call.1} parent=39 // pred_check_branch
          %365 = sbr.rel (%p363) target = $region60
        $region59: #{tpu_custom_call.1} parent=39 // pred_region
          %s366 = scalar_lea.smem [#allocation2], 0
          %367 = sst [smem:[%s366]] 0.0
        $region60: #{tpu_custom_call.1} parent=39 // pred_fallthru
          _
        %v368 = vld [vmem:[%s292] sm:$0xff]
        %v369 = vld [vmem:[%s292 + $0x8] sm:$0xff]
        %v370 = vld [vmem:[%s301] sm:$0xff]
        %v371 = vld [vmem:[%s301 + $0x8] sm:$0xff]
        %v372 = vld [vmem:[%s310] sm:$0xff]
        %v373 = vld [vmem:[%s310 + $0x8] sm:$0xff]
        %v374 = vld [vmem:[%s319] sm:$0xff]
        %v375 = vld [vmem:[%s319 + $0x8] sm:$0xff]
        %v376 = vsub.f32 %v368, %v370
        %v377 = vsub.f32 %v369, %v371
        %vm378 = vcmp.lt.f32.partialorder %v374, %v372
        %vm379 = vcmp.lt.f32.partialorder %v375, %v373
        %v380 = vsel %vm378, 1, 0
        %v381 = vsel %vm379, 1, 0
        %v382 = vcvt.s32.f32 %v380
        %v383 = vcvt.s32.f32 %v381
        %v384 = vsub.f32 %v372, %v374
        %v385 = vsub.f32 %v373, %v375
        %v386 = vsub.f32 0.3, %v382
        %v387 = vsub.f32 0.3, %v383
        %v388 = vand.u32 2147483647, %v386
        %v389 = vand.u32 2147483647, %v387
        %v390 = vmul.f32 %v384, %v384
        %v391 = vmul.f32 %v385, %v385
        %v392 = vmul.f32 %v388, %v390
        %v393 = vmul.f32 %v389, %v391
        %v394 = vld [vmem:[%s361] sm:$0x1]
        %v395 = vmul.f32 %v376, %v376
        %v396 = vmul.f32 %v377, %v377
        %v397 = vmul.f32 %v394, 0.5
        %v399 = vlaneseq
        %v400 = vshrl.u32 %v399, 7
        %v401 = vsub.s32 0, %v400
        %v402 = vrot.slane %v397, %v401
        %403 = vset.pattern.permute.xlu0 0
        %404 = vperm.xlu0 %403, %v402
        %v405 = vpop.permute.xlu0 %404
        %v407 = vmul.f32 %v405, %v392
        %v408 = vmul.f32 %v405, %v393
        %v409 = vadd.f32 %v395, %v407
        %v410 = vadd.f32 %v396, %v408
        %vm411 = vcmask 130048
        %v412 = vsel %vm411, %v409, 0.0
        %v413 = vsel %vm411, %v410, 0.0
        %v414 = vadd.f32 %v412, %v413
        %415 = vadd.xlane.f32.xlu0 %v414
        %v416 = vpop.xlane.xlu0 %415
        %v417 = vrot.slane %v416, 4
        %v418 = vadd.f32 %v416, %v417
        %v419 = vrot.slane %v418, 2
        %v420 = vadd.f32 %v418, %v419
        %v421 = vrot.slane %v420, 1
        %v422 = vadd.f32 %v420, %v421
        %s423 = vtos %v422
        %s424 = smul.f32 %s423, 0.0013020834
        %vm427 = vcmask 1040384
        %v428 = vrot.slane %v372, 7
        %v429 = vrot.slane %v373, 7
        %v430 = vsel %vm427, %v428, %v429
        %v433 = vsub.f32 %v372, %v428
        %v434 = vsub.f32 %v373, %v430
        %435 = vrot.lane.b32.xlu0 %v372, 1
        %v436 = vpop.permute.xlu0 %435
        %437 = vrot.lane.b32.xlu0 %v373, 1
        %v438 = vpop.permute.xlu0 %437
        %v441 = vsub.f32 %v372, %v436
        %v442 = vsub.f32 %v373, %v438
        %v443 = vmul.f32 %v433, %v433
        %v444 = vmul.f32 %v434, %v434
        %vm447 = vcmask 1046528
        %v448 = vrot.slane %v443, 1
        %v449 = vrot.slane %v444, 1
        %v450 = vsel %vm447, %v448, %v449
        %v453 = vsel %vm411, %v450, 0.0
        %vm454 = vcmask 129024
        %v455 = vsel %vm454, %v449, 0.0
        %v456 = vadd.f32 %v453, %v455
        %457 = vadd.xlane.f32.xlu0 %v456
        %v458 = vpop.xlane.xlu0 %457
        %v459 = vrot.slane %v458, 4
        %v460 = vadd.f32 %v458, %v459
        %v461 = vrot.slane %v460, 2
        %v462 = vadd.f32 %v460, %v461
        %v463 = vrot.slane %v462, 1
        %v464 = vadd.f32 %v462, %v463
        %s465 = vtos %v464
        %s466 = smul.f32 %s465, 0.0013888889
        %v467 = vmul.f32 %v441, %v441
        %v468 = vmul.f32 %v442, %v442
        %471 = vrot.lane.b32.xlu0 %v467, 127
        %v472 = vpop.permute.xlu0 %471
        %473 = vrot.lane.b32.xlu0 %v468, 127
        %v474 = vpop.permute.xlu0 %473
        %vm477 = vcmask 121856
        %v478 = vsel %vm477, %v472, 0.0
        %v479 = vsel %vm477, %v474, 0.0
        %v480 = vadd.f32 %v478, %v479
        %481 = vadd.xlane.f32.xlu0 %v480
        %v482 = vpop.xlane.xlu0 %481
        %v483 = vrot.slane %v482, 4
        %v484 = vadd.f32 %v482, %v483
        %v485 = vrot.slane %v484, 2
        %v486 = vadd.f32 %v484, %v485
        %v487 = vrot.slane %v486, 1
        %v488 = vadd.f32 %v486, %v487
        %s489 = vtos %v488
        %s490 = smul.f32 %s489, 0.0013888889
        %s491 = sadd.f32 %s466, %s490
        %s492 = smul.f32 %s491, 0.05
        %s493 = sadd.f32 %s424, %s492
        %s494 = sld [smem:[#allocation2]]
        %s495 = sadd.f32 %s494, %s493
        %s496 = scalar_lea.smem [#allocation2], 0
        %497 = sst [smem:[%s496]] %s495
        %v498 = vadd.f32 %v370, %v374
        %v499 = vadd.f32 %v371, %v375
        %504 = vrot.lane.b32.xlu0 %v498, 114
        %v505 = vpop.permute.xlu0 %504
        %506 = vrot.lane.b32.xlu0 %v499, 114
        %v507 = vpop.permute.xlu0 %506
        %508 = vrot.lane.b32.xlu0 %v368, 114
        %v509 = vpop.permute.xlu0 %508
        %510 = vrot.lane.b32.xlu0 %v369, 114
        %v511 = vpop.permute.xlu0 %510
        %516 = vrot.lane.b32.xlu0 %v498, 2
        %v517 = vpop.permute.xlu0 %516
        %518 = vrot.lane.b32.xlu0 %v499, 2
        %v519 = vpop.permute.xlu0 %518
        %520 = vrot.lane.b32.xlu0 %v368, 2
        %v521 = vpop.permute.xlu0 %520
        %522 = vrot.lane.b32.xlu0 %v369, 2
        %v523 = vpop.permute.xlu0 %522
        %528 = vrot.lane.b32.xlu0 %v498, 18
        %v529 = vpop.permute.xlu0 %528
        %530 = vrot.lane.b32.xlu0 %v499, 18
        %v531 = vpop.permute.xlu0 %530
        %532 = vrot.lane.b32.xlu0 %v368, 18
        %v533 = vpop.permute.xlu0 %532
        %534 = vrot.lane.b32.xlu0 %v369, 18
        %v535 = vpop.permute.xlu0 %534
        %vm540 = vcmask 15360
        %v541 = vsel %vm540, %v505, %v517
        %v542 = vsel %vm540, %v507, %v519
        %v543 = vsel %vm540, %v509, %v521
        %v544 = vsel %vm540, %v511, %v523
        %vm545 = vcmask 146432
        %v546 = vsel %vm545, %v541, %v529
        %v547 = vsel %vm545, %v542, %v531
        %v548 = vsel %vm545, %v543, %v533
        %v549 = vsel %vm545, %v544, %v535
        %v552 = vrot.slane %v547, 6
        %v553 = vrot.slane %v549, 6
        %vm558 = vcmask 1041408
        %v559 = vrot.slane %v546, 6
        %v560 = vsel %vm558, %v559, %v552
        %v561 = vrot.slane %v548, 6
        %v562 = vsel %vm558, %v561, %v553
        %v567 = vsel %vm558, %v552, %v559
        %v568 = vsel %vm558, %v553, %v561
        %v569 = vmul.f32 %v567, -5.0
        %v570 = vmul.f32 %v560, -5.0
        %v571 = vmul.f32 %v568, -5.0
        %v572 = vmul.f32 %v562, -5.0
        %575 = vrot.lane.b32.xlu0 %v567, 124
        %v576 = vpop.permute.xlu0 %575
        %577 = vrot.lane.b32.xlu0 %v560, 124
        %v578 = vpop.permute.xlu0 %577
        %579 = vrot.lane.b32.xlu0 %v568, 124
        %v580 = vpop.permute.xlu0 %579
        %581 = vrot.lane.b32.xlu0 %v562, 124
        %v582 = vpop.permute.xlu0 %581
        %v587 = vadd.f32 %v567, %v576
        %v588 = vadd.f32 %v560, %v578
        %v589 = vadd.f32 %v568, %v580
        %v590 = vadd.f32 %v562, %v582
        %v591 = vmul.f32 %v587, -0.083333336
        %v592 = vmul.f32 %v588, -0.083333336
        %v593 = vmul.f32 %v589, -0.083333336
        %v594 = vmul.f32 %v590, -0.083333336
        %599 = vrot.lane.b32.xlu0 %v591, 2
        %v600 = vpop.permute.xlu0 %599
        %601 = vrot.lane.b32.xlu0 %v592, 2
        %v602 = vpop.permute.xlu0 %601
        %603 = vrot.lane.b32.xlu0 %v593, 2
        %v604 = vpop.permute.xlu0 %603
        %605 = vrot.lane.b32.xlu0 %v594, 2
        %v606 = vpop.permute.xlu0 %605
        %v611 = vadd.f32 %v569, %v600
        %v612 = vadd.f32 %v570, %v602
        %v613 = vadd.f32 %v571, %v604
        %v614 = vadd.f32 %v572, %v606
        %615 = vrot.lane.b32.xlu0 %v567, 126
        %v616 = vpop.permute.xlu0 %615
        %617 = vrot.lane.b32.xlu0 %v560, 126
        %v618 = vpop.permute.xlu0 %617
        %619 = vrot.lane.b32.xlu0 %v568, 126
        %v620 = vpop.permute.xlu0 %619
        %621 = vrot.lane.b32.xlu0 %v562, 126
        %v622 = vpop.permute.xlu0 %621
        %v627 = vadd.f32 %v567, %v616
        %v628 = vadd.f32 %v560, %v618
        %v629 = vadd.f32 %v568, %v620
        %v630 = vadd.f32 %v562, %v622
        %v631 = vmul.f32 %v627, 1.3333334
        %v632 = vmul.f32 %v628, 1.3333334
        %v633 = vmul.f32 %v629, 1.3333334
        %v634 = vmul.f32 %v630, 1.3333334
        %639 = vrot.lane.b32.xlu0 %v631, 1
        %v640 = vpop.permute.xlu0 %639
        %641 = vrot.lane.b32.xlu0 %v632, 1
        %v642 = vpop.permute.xlu0 %641
        %643 = vrot.lane.b32.xlu0 %v633, 1
        %v644 = vpop.permute.xlu0 %643
        %645 = vrot.lane.b32.xlu0 %v634, 1
        %v646 = vpop.permute.xlu0 %645
        %v651 = vadd.f32 %v611, %v640
        %v652 = vadd.f32 %v612, %v642
        %v653 = vadd.f32 %v613, %v644
        %v654 = vadd.f32 %v614, %v646
        %vm655 = vcmask 1043456
        %v656 = vrot.slane %v567, 4
        %v657 = vrot.slane %v560, 4
        %v658 = vsel %vm655, %v656, %v657
        %v659 = vsel %vm655, %v657, %v656
        %v660 = vrot.slane %v568, 4
        %v661 = vrot.slane %v562, 4
        %v662 = vsel %vm655, %v660, %v661
        %v663 = vsel %vm655, %v661, %v660
        %v670 = vadd.f32 %v567, %v658
        %v671 = vadd.f32 %v560, %v659
        %v672 = vadd.f32 %v567, %v656
        %v673 = vadd.f32 %v568, %v662
        %v674 = vadd.f32 %v562, %v663
        %v675 = vadd.f32 %v568, %v660
        %v676 = vmul.f32 %v670, -0.083333336
        %v677 = vmul.f32 %v671, -0.083333336
        %v678 = vmul.f32 %v672, -0.083333336
        %v679 = vmul.f32 %v673, -0.083333336
        %v680 = vmul.f32 %v674, -0.083333336
        %v681 = vmul.f32 %v675, -0.083333336
        %v688 = vrot.slane %v676, 6
        %v689 = vrot.slane %v677, 6
        %v690 = vsel %vm558, %v688, %v689
        %v691 = vrot.slane %v678, 6
        %v692 = vsel %vm558, %v689, %v691
        %v693 = vrot.slane %v679, 6
        %v694 = vrot.slane %v680, 6
        %v695 = vsel %vm558, %v693, %v694
        %v696 = vrot.slane %v681, 6
        %v697 = vsel %vm558, %v694, %v696
        %v704 = vadd.f32 %v651, %v688
        %v705 = vadd.f32 %v652, %v690
        %v706 = vadd.f32 %v651, %v692
        %v707 = vadd.f32 %v653, %v693
        %v708 = vadd.f32 %v654, %v695
        %v709 = vadd.f32 %v653, %v697
        %vm710 = vcmask 1045504
        %v711 = vrot.slane %v567, 2
        %v712 = vrot.slane %v560, 2
        %v713 = vsel %vm710, %v711, %v712
        %v714 = vsel %vm710, %v712, %v711
        %v715 = vrot.slane %v568, 2
        %v716 = vrot.slane %v562, 2
        %v717 = vsel %vm710, %v715, %v716
        %v718 = vsel %vm710, %v716, %v715
        %v725 = vadd.f32 %v567, %v713
        %v726 = vadd.f32 %v560, %v714
        %v727 = vadd.f32 %v567, %v711
        %v728 = vadd.f32 %v568, %v717
        %v729 = vadd.f32 %v562, %v718
        %v730 = vadd.f32 %v568, %v715
        %v731 = vmul.f32 %v725, 1.3333334
        %v732 = vmul.f32 %v726, 1.3333334
        %v733 = vmul.f32 %v727, 1.3333334
        %v734 = vmul.f32 %v728, 1.3333334
        %v735 = vmul.f32 %v729, 1.3333334
        %v736 = vmul.f32 %v730, 1.3333334
        %v743 = vrot.slane %v731, 7
        %v744 = vrot.slane %v732, 7
        %v745 = vsel %vm427, %v743, %v744
        %v746 = vrot.slane %v733, 7
        %v747 = vsel %vm427, %v744, %v746
        %v748 = vrot.slane %v734, 7
        %v749 = vrot.slane %v735, 7
        %v750 = vsel %vm427, %v748, %v749
        %v751 = vrot.slane %v736, 7
        %v752 = vsel %vm427, %v749, %v751
        %v759 = vadd.f32 %v704, %v743
        %v760 = vadd.f32 %v705, %v745
        %v761 = vadd.f32 %v706, %v747
        %v762 = vadd.f32 %v707, %v748
        %v763 = vadd.f32 %v708, %v750
        %v764 = vadd.f32 %v709, %v752
        %v765 = vmul.f32 %v759, 0.2
        %v766 = vmul.f32 %v760, 0.2
        %v767 = vmul.f32 %v761, 0.2
        %v768 = vmul.f32 %v762, 0.2
        %v769 = vmul.f32 %v763, 0.2
        %v770 = vmul.f32 %v764, 0.2
        %v771 = vmul.f32 %v765, %v765
        %v772 = vmul.f32 %v766, %v766
        %v773 = vmul.f32 %v767, %v767
        %v774 = vmul.f32 %v768, %v768
        %v775 = vmul.f32 %v769, %v769
        %v776 = vmul.f32 %v770, %v770
        %v777 = vsub.f32 0.0, %v771
        %v778 = vsub.f32 0.0, %v772
        %v779 = vsub.f32 0.0, %v773
        %v780 = vsub.f32 0.0, %v774
        %v781 = vsub.f32 0.0, %v775
        %v782 = vsub.f32 0.0, %v776
        %v783 = vmul.f32 %v777, 1.442695
        %v784 = vpow.pop %v783
        %v785 = vmul.f32 %v778, 1.442695
        %v786 = vpow.pop %v785
        %v787 = vmul.f32 %v779, 1.442695
        %v788 = vpow.pop %v787
        %v789 = vmul.f32 %v780, 1.442695
        %v790 = vpow.pop %v789
        %v791 = vmul.f32 %v781, 1.442695
        %v792 = vpow.pop %v791
        %v793 = vmul.f32 %v782, 1.442695
        %v794 = vpow.pop %v793
        %v795 = vmul.f32 %v784, %v759
        %v796 = vmul.f32 %v786, %v760
        %v797 = vmul.f32 %v788, %v761
        %v798 = vmul.f32 %v790, %v762
        %v799 = vmul.f32 %v792, %v763
        %v800 = vmul.f32 %v794, %v764
        %v801 = vmul.f32 %v795, -5.0
        %v802 = vmul.f32 %v796, -5.0
        %v803 = vmul.f32 %v797, -5.0
        %v804 = vmul.f32 %v798, -5.0
        %v805 = vmul.f32 %v799, -5.0
        %v806 = vmul.f32 %v800, -5.0
        %813 = vrot.lane.b32.xlu0 %v795, 124
        %v814 = vpop.permute.xlu0 %813
        %815 = vrot.lane.b32.xlu0 %v796, 124
        %v816 = vpop.permute.xlu0 %815
        %817 = vrot.lane.b32.xlu0 %v797, 124
        %v818 = vpop.permute.xlu0 %817
        %819 = vrot.lane.b32.xlu0 %v798, 124
        %v820 = vpop.permute.xlu0 %819
        %821 = vrot.lane.b32.xlu0 %v799, 124
        %v822 = vpop.permute.xlu0 %821
        %823 = vrot.lane.b32.xlu0 %v800, 124
        %v824 = vpop.permute.xlu0 %823
        %v831 = vadd.f32 %v795, %v814
        %v832 = vadd.f32 %v796, %v816
        %v833 = vadd.f32 %v797, %v818
        %v834 = vadd.f32 %v798, %v820
        %v835 = vadd.f32 %v799, %v822
        %v836 = vadd.f32 %v800, %v824
        %v837 = vmul.f32 %v831, -0.083333336
        %v838 = vmul.f32 %v832, -0.083333336
        %v839 = vmul.f32 %v833, -0.083333336
        %v840 = vmul.f32 %v834, -0.083333336
        %v841 = vmul.f32 %v835, -0.083333336
        %v842 = vmul.f32 %v836, -0.083333336
        %849 = vrot.lane.b32.xlu0 %v837, 2
        %v850 = vpop.permute.xlu0 %849
        %851 = vrot.lane.b32.xlu0 %v838, 2
        %v852 = vpop.permute.xlu0 %851
        %853 = vrot.lane.b32.xlu0 %v839, 2
        %v854 = vpop.permute.xlu0 %853
        %855 = vrot.lane.b32.xlu0 %v840, 2
        %v856 = vpop.permute.xlu0 %855
        %857 = vrot.lane.b32.xlu0 %v841, 2
        %v858 = vpop.permute.xlu0 %857
        %859 = vrot.lane.b32.xlu0 %v842, 2
        %v860 = vpop.permute.xlu0 %859
        %v867 = vadd.f32 %v801, %v850
        %v868 = vadd.f32 %v802, %v852
        %v869 = vadd.f32 %v803, %v854
        %v870 = vadd.f32 %v804, %v856
        %v871 = vadd.f32 %v805, %v858
        %v872 = vadd.f32 %v806, %v860
        %873 = vrot.lane.b32.xlu0 %v795, 126
        %v874 = vpop.permute.xlu0 %873
        %875 = vrot.lane.b32.xlu0 %v796, 126
        %v876 = vpop.permute.xlu0 %875
        %877 = vrot.lane.b32.xlu0 %v797, 126
        %v878 = vpop.permute.xlu0 %877
        %879 = vrot.lane.b32.xlu0 %v798, 126
        %v880 = vpop.permute.xlu0 %879
        %881 = vrot.lane.b32.xlu0 %v799, 126
        %v882 = vpop.permute.xlu0 %881
        %883 = vrot.lane.b32.xlu0 %v800, 126
        %v884 = vpop.permute.xlu0 %883
        %v891 = vadd.f32 %v795, %v874
        %v892 = vadd.f32 %v796, %v876
        %v893 = vadd.f32 %v797, %v878
        %v894 = vadd.f32 %v798, %v880
        %v895 = vadd.f32 %v799, %v882
        %v896 = vadd.f32 %v800, %v884
        %v897 = vmul.f32 %v891, 1.3333334
        %v898 = vmul.f32 %v892, 1.3333334
        %v899 = vmul.f32 %v893, 1.3333334
        %v900 = vmul.f32 %v894, 1.3333334
        %v901 = vmul.f32 %v895, 1.3333334
        %v902 = vmul.f32 %v896, 1.3333334
        %909 = vrot.lane.b32.xlu0 %v897, 1
        %v910 = vpop.permute.xlu0 %909
        %911 = vrot.lane.b32.xlu0 %v898, 1
        %v912 = vpop.permute.xlu0 %911
        %913 = vrot.lane.b32.xlu0 %v899, 1
        %v914 = vpop.permute.xlu0 %913
        %915 = vrot.lane.b32.xlu0 %v900, 1
        %v916 = vpop.permute.xlu0 %915
        %917 = vrot.lane.b32.xlu0 %v901, 1
        %v918 = vpop.permute.xlu0 %917
        %919 = vrot.lane.b32.xlu0 %v902, 1
        %v920 = vpop.permute.xlu0 %919
        %v927 = vadd.f32 %v867, %v910
        %v928 = vadd.f32 %v868, %v912
        %v929 = vadd.f32 %v869, %v914
        %v930 = vadd.f32 %v870, %v916
        %v931 = vadd.f32 %v871, %v918
        %v932 = vadd.f32 %v872, %v920
        %v933 = vrot.slane %v795, 4
        %v934 = vrot.slane %v796, 4
        %v935 = vsel %vm655, %v933, %v934
        %v936 = vrot.slane %v797, 4
        %v937 = vsel %vm655, %v934, %v936
        %v938 = vrot.slane %v798, 4
        %v939 = vrot.slane %v799, 4
        %v940 = vsel %vm655, %v938, %v939
        %v941 = vrot.slane %v800, 4
        %v942 = vsel %vm655, %v939, %v941
        %v947 = vadd.f32 %v795, %v935
        %v948 = vadd.f32 %v796, %v937
        %v949 = vadd.f32 %v798, %v940
        %v950 = vadd.f32 %v799, %v942
        %v951 = vmul.f32 %v947, -0.083333336
        %v952 = vmul.f32 %v948, -0.083333336
        %v953 = vmul.f32 %v949, -0.083333336
        %v954 = vmul.f32 %v950, -0.083333336
        %v959 = vrot.slane %v951, 6
        %v960 = vrot.slane %v952, 6
        %v961 = vsel %vm558, %v959, %v960
        %v962 = vrot.slane %v953, 6
        %v963 = vrot.slane %v954, 6
        %v964 = vsel %vm558, %v962, %v963
        %v971 = vadd.f32 %v927, %v959
        %v972 = vadd.f32 %v928, %v961
        %v973 = vadd.f32 %v929, %v960
        %v974 = vadd.f32 %v930, %v962
        %v975 = vadd.f32 %v931, %v964
        %v976 = vadd.f32 %v932, %v963
        %v977 = vrot.slane %v795, 2
        %v978 = vrot.slane %v796, 2
        %v979 = vsel %vm710, %v977, %v978
        %v980 = vrot.slane %v797, 2
        %v981 = vsel %vm710, %v978, %v980
        %v982 = vrot.slane %v798, 2
        %v983 = vrot.slane %v799, 2
        %v984 = vsel %vm710, %v982, %v983
        %v985 = vrot.slane %v800, 2
        %v986 = vsel %vm710, %v983, %v985
        %v991 = vadd.f32 %v795, %v979
        %v992 = vadd.f32 %v796, %v981
        %v993 = vadd.f32 %v798, %v984
        %v994 = vadd.f32 %v799, %v986
        %v995 = vmul.f32 %v991, 1.3333334
        %v996 = vmul.f32 %v992, 1.3333334
        %v997 = vmul.f32 %v993, 1.3333334
        %v998 = vmul.f32 %v994, 1.3333334
        %v1003 = vrot.slane %v995, 7
        %v1004 = vrot.slane %v996, 7
        %v1005 = vsel %vm427, %v1003, %v1004
        %v1006 = vrot.slane %v997, 7
        %v1007 = vrot.slane %v998, 7
        %v1008 = vsel %vm427, %v1006, %v1007
        %v1015 = vadd.f32 %v971, %v1003
        %v1016 = vadd.f32 %v972, %v1005
        %v1017 = vadd.f32 %v973, %v1004
        %v1018 = vadd.f32 %v974, %v1006
        %v1019 = vadd.f32 %v975, %v1008
        %v1020 = vadd.f32 %v976, %v1007
        %v1021 = vsub.f32 %v368, %v498
        %v1022 = vsub.f32 %v369, %v499
        %v1026 = vrot.slane %v1015, 2
        %v1027 = vrot.slane %v1016, 2
        %v1028 = vsel %vm710, %v1026, %v1027
        %v1029 = vrot.slane %v1017, 2
        %v1030 = vsel %vm710, %v1027, %v1029
        %1031 = vrot.lane.b32.xlu0 %v1028, 126
        %v1032 = vpop.permute.xlu0 %1031
        %1033 = vrot.lane.b32.xlu0 %v1030, 126
        %v1034 = vpop.permute.xlu0 %1033
        %v1037 = vsub.f32 %v1021, %v1032
        %v1038 = vsub.f32 %v1022, %v1034
        %v1042 = vrot.slane %v1018, 2
        %v1043 = vrot.slane %v1019, 2
        %v1044 = vsel %vm710, %v1042, %v1043
        %v1045 = vrot.slane %v1020, 2
        %v1046 = vsel %vm710, %v1043, %v1045
        %1047 = vrot.lane.b32.xlu0 %v1044, 126
        %v1048 = vpop.permute.xlu0 %1047
        %1049 = vrot.lane.b32.xlu0 %v1046, 126
        %v1050 = vpop.permute.xlu0 %1049
        %v1053 = vsub.f32 %v1021, %v1048
        %v1054 = vsub.f32 %v1022, %v1050
        %v1055 = vmul.f32 %v1037, %v1037
        %v1056 = vmul.f32 %v1038, %v1038
        %v1057 = vmul.f32 %v1053, %v1053
        %v1058 = vmul.f32 %v1054, %v1054
        %v1059 = vadd.f32 %v1055, %v1057
        %v1060 = vadd.f32 %v1056, %v1058
        %v1063 = vrot.slane %v1059, 2
        %v1064 = vrot.slane %v1060, 2
        %v1065 = vsel %vm710, %v1063, %v1064
        %1066 = vrot.lane.b32.xlu0 %v1065, 126
        %v1067 = vpop.permute.xlu0 %1066
        %1068 = vrot.lane.b32.xlu0 %v1064, 126
        %v1069 = vpop.permute.xlu0 %1068
        %vm1072 = vcmask 105472
        %v1073 = vsel %vm1072, %v1067, 0.0
        %vm1074 = vcmask 102400
        %v1075 = vsel %vm1074, %v1069, 0.0
        %v1076 = vadd.f32 %v1073, %v1075
        %1077 = vadd.xlane.f32.xlu0 %v1076
        %v1078 = vpop.xlane.xlu0 %1077
        %v1079 = vrot.slane %v1078, 4
        %v1080 = vadd.f32 %v1078, %v1079
        %v1081 = vrot.slane %v1080, 2
        %v1082 = vadd.f32 %v1080, %v1081
        %v1083 = vrot.slane %v1082, 1
        %v1084 = vadd.f32 %v1082, %v1083
        %s1085 = vtos %v1084
        %s1086 = smul.f32 %s1085, 0.00295858
        %s1087 = sld [smem:[#allocation2]]
        %s1088 = smul.f32 %s1086, 0.007
        %s1089 = sadd.f32 %s1087, %s1088
        %1090 = sst [smem:[%s496]] %s1089
        %s1091 = sld [smem:[#allocation2]]
        %v1092 = vstv %s1091
        %1093 = vst [vmem:[#allocation11] sm:$0x1] %v1092
        // Predicated region
        $region61: #{tpu_custom_call.1} parent=39 // pred_check
          %p1094 = pneg %p169
        $region62: #{tpu_custom_call.1} parent=39 // pred_check_branch
          %1096 = sbr.rel (%p1094) target = $region64
        $region63: #{tpu_custom_call.1} parent=39 // pred_region
          %s1098 = ssub.s32 16, 16
          %1099 = vsyncadd [#allocation5], %s1098
          %s1101 = sshll.u32 [#allocation11], 4
          %s1102 = int_to_ptr.vmem [resolvable:$true] %s1101
          %1104 = dma.vmem_to_hbm [thread:$0]  %s1102, 16, %s5, [#allocation5]
        $region64: #{tpu_custom_call.1} parent=39 // pred_fallthru
          _
        // Predicated region
        $region65: #{tpu_custom_call.1} parent=39 // pred_check
          %p1105 = pneg %p169
        $region66: #{tpu_custom_call.1} parent=39 // pred_check_branch
          %1107 = sbr.rel (%p1105) target = $region68
        $region67: #{tpu_custom_call.1} parent=39 // pred_region
          %1108 = dma.done [#allocation5], 16
        $region68: #{tpu_custom_call.1} parent=39 // pred_fallthru
          _
      $region40: #{tpu_custom_call.1} parent=5 // pred_fallthru
        _
      %p1109 = scmp.le.s32.totalorder 2, %s21
      // Predicated region
      $region69: #{tpu_custom_call.1} parent=5 // pred_check
        %p1110 = pneg %p1109
      $region70: #{tpu_custom_call.1} parent=5 // pred_check_branch
        %1112 = sbr.rel (%p1110) target = $region72
      $region71: #{tpu_custom_call.1} parent=5 // pred_region
        %s1113 = ssub.s32 %s21, 2
      $region72: #{tpu_custom_call.1} parent=5 // pred_fallthru
        _
    $region6: #{tpu_custom_call.1} parent=1 // loop_footer
      %s25 = sadd.s32 1, %s21
    $region7: #{tpu_custom_call.1} parent=1 // loop_footer_branch
      %20 = sbr.rel target = $region3
    $region8: #{tpu_custom_call.1} parent=1 // loop_exit
      _
    %1114 = vsyncpa [#allocation4], 1
    %s1115 = scalar_lea.sflag [#allocation4], 1
    %1116 = vsyncpa %s1115, 1
    %1117 = vsyncpa [#allocation7], 1
    %s1118 = scalar_lea.sflag [#allocation7], 1
    %1119 = vsyncpa %s1118, 1
    %1120 = vsyncpa [#allocation10], 1
    %s1121 = scalar_lea.sflag [#allocation10], 1
    %1122 = vsyncpa %s1121, 1
    %1123 = vsyncpa [#allocation5], 1
    %s1124 = scalar_lea.sflag [#allocation5], 1
    %1125 = vsyncpa %s1124, 1

</llo_original>
